<compile_context>
chip_gen: v7x
topology: tpu7x:2x2x1
jax: 0.10.0
libtpu: 0.0.40
codegen_flags: <defaults>
</compile_context>

<pallas_src>
import functools
from dataclasses import dataclass
from typing import List, Optional

import jax
import jax.numpy as jnp
from jax.experimental import pallas as pl
from jax.experimental.pallas import tpu as pltpu

_SUBLANE = 8
_LANE = 128
_TILE_BUDGET_BYTES = 8 * 1024 * 1024     # per double-buffered working set (v7x-safe)
_VMEM_LIMIT_BYTES = 32 * 1024 * 1024     # fits v5e/v6e (128 MiB) and v7x (64 MiB)


# ---------------------------------------------------------------------------
# config stand-in (AdvConfig / AtkConfig from the original codebase)
# ---------------------------------------------------------------------------
@dataclass
class AdvConfig:
    group_name: str
    type: str                                   # 'categorical' | 'continuous'
    loss_fn: str                                # 'mse' | 'mae' | 'ce' | 'gce'
    loss_weight: float = 1.0
    loss_class_weights: Optional[List[float]] = None
    loss_gce_alpha: Optional[float] = None


# ---------------------------------------------------------------------------
# tiling helpers
# ---------------------------------------------------------------------------
def _round_up(x, m):
    return ((x + m - 1) // m) * m


def _sublane_multiple(dtype):
    """Sublane packing granularity for `dtype` (8 f32, 16 bf16, 32 int8/fp8)."""
    return _SUBLANE * max(1, 4 // jnp.dtype(dtype).itemsize)


def _pick_tiling(rows, bytes_per_row, sublane,
                 budget_bytes=_TILE_BUDGET_BYTES, min_tiles=2):
    """Pick (tile_rows, num_tiles, padded_rows) for a batch-like axis.

    `bytes_per_row` must already include 128-lane padding of narrow blocks,
    double buffering and in-kernel f32 temporaries.  The tile is kept under
    the VMEM budget, stepped in multiples of the dtype's sublane packing, and
    for large-enough problems the grid gets >= `min_tiles` steps so v7x's two
    TensorCores both receive work.
    """
    if rows <= sublane:
        return rows, 1, rows                       # full-extent block is always legal
    cap = max(sublane,
              (budget_bytes // max(bytes_per_row, 1)) // sublane * sublane)
    n_tiles = pl.cdiv(rows, cap)
    if rows > min_tiles * sublane:
        n_tiles = max(n_tiles, min_tiles)
    tile = _round_up(pl.cdiv(rows, n_tiles), sublane)
    padded = _round_up(rows, tile)
    return tile, padded // tile, padded


# ---------------------------------------------------------------------------
# kernels
# ---------------------------------------------------------------------------
def _write_partials(out_ref, num, den):
    """Write scalars (num, den) into sublanes 0/1 of a lane-dense (8,128) block."""
    sub = jax.lax.broadcasted_iota(jnp.int32, out_ref.shape, 0)
    out_ref[...] = jnp.where(sub == 0, num, jnp.where(sub == 1, den, 0.0))


def _ce_kernel(logits_ref, tgt_ref, out_ref, *, weights):
    """(Optionally class-weighted) CE partials for one batch tile of one
    adversary.  Padded rows carry target == -1 -> weight 0 (masked)."""
    logits = logits_ref[...].astype(jnp.float32)                # (tb, C)
    tgt = tgt_ref[...]                                          # (tb, 1) int32
    tb, c = logits.shape

    m = jnp.max(logits, axis=1, keepdims=True)
    shifted = logits - m
    lse = jnp.log(jnp.sum(jnp.exp(shifted), axis=1, keepdims=True))   # (tb, 1)

    cls = jax.lax.broadcasted_iota(jnp.int32, (tb, c), 1)
    onehot = cls == tgt
    tgt_shift = jnp.sum(jnp.where(onehot, shifted, 0.0), axis=1, keepdims=True)
    nll = lse - tgt_shift                                       # (tb, 1)

    # Class weights are a static Python list -> compile-time constants.
    # TODO(synk): for very large class counts, switch to a class-dim grid axis
    # with an online logsumexp accumulator instead of one (tb, C) block.
    w_t = jnp.zeros((tb, 1), jnp.float32)
    for ci, wv in enumerate(weights):
        w_t = jnp.where(tgt == ci, jnp.float32(wv), w_t)

    _write_partials(out_ref, jnp.sum(w_t * nll), jnp.sum(w_t))


def _gce_kernel(logits_ref, tgt_ref, out_ref, *, weights, q, eps):
    """Generalized (Box-Cox) CE partials for one batch tile of one adversary.
    Padded rows carry target == -1 -> masked out of num and den."""
    logits = logits_ref[...].astype(jnp.float32)                # (tb, C)
    tgt = tgt_ref[...]                                          # (tb, 1) int32
    tb, c = logits.shape

    m = jnp.max(logits, axis=1, keepdims=True)
    e = jnp.exp(logits - m)
    denom = jnp.sum(e, axis=1, keepdims=True)

    cls = jax.lax.broadcasted_iota(jnp.int32, (tb, c), 1)
    onehot = cls == tgt
    e_t = jnp.sum(jnp.where(onehot, e, 0.0), axis=1, keepdims=True)

    w_t = jnp.zeros((tb, 1), jnp.float32)
    for ci, wv in enumerate(weights):
        w_t = jnp.where(tgt == ci, jnp.float32(wv), w_t)

    p_t = w_t * e_t / denom + jnp.float32(eps)                  # (tb, 1), > 0
    # p_t ** q == exp(q * log(p_t))  -> EUP
    loss = (1.0 - jnp.exp(jnp.float32(q) * jnp.log(p_t))) / jnp.float32(q)

    valid = (tgt >= 0).astype(jnp.float32)
    _write_partials(out_ref, jnp.sum(valid * loss), jnp.sum(valid))


def _reg_kernel(x_ref, y_ref, out_ref, *, square):
    """MSE / MAE numerator partials for one lane-dense (tr, 128) tile of one
    adversary.  Padded elements are zero in both inputs -> zero diff."""
    d = x_ref[...].astype(jnp.float32) - y_ref[...].astype(jnp.float32)
    s = jnp.sum(d * d) if square else jnp.sum(jnp.abs(d))
    _write_partials(out_ref, s, 0.0)     # denominator (#elements) is static


# ---------------------------------------------------------------------------
# fused per-group pallas_call wrappers
# ---------------------------------------------------------------------------
def _fused_group_call(kernel, in_specs, args, n_adv, num_tiles):
    return pl.pallas_call(
        kernel,
        out_shape=jax.ShapeDtypeStruct((n_adv, num_tiles, _SUBLANE, _LANE),
                                       jnp.float32),
        grid=(num_tiles, n_adv),     # adversaries innermost: target block is
                                     # revisited -> Pallas skips its re-DMA.
        in_specs=in_specs,
        out_specs=pl.BlockSpec((None, None, _SUBLANE, _LANE),
                               lambda t, n: (n, t, 0, 0)),
        compiler_params=pltpu.CompilerParams(
            dimension_semantics=("parallel", "parallel"),
            vmem_limit_bytes=_VMEM_LIMIT_BYTES),
    )(*args)


def _categorical_group_loss(logits_list, targets, class_weights,
                            *, gce_q=None, eps=1e-9):
    """Mean over adversaries of (G)CE loss; one fused kernel for the group."""
    logits = jnp.stack(logits_list, axis=0)                     # (N, B, C)
    n_adv, b, c = logits.shape
    weights = (tuple(float(w) for w in class_weights)
               if class_weights else (1.0,) * c)
    assert len(weights) == c, "class weight length must match class count"
    tgt = targets.astype(jnp.int32).reshape(b, 1)

    itm = jnp.dtype(logits.dtype).itemsize
    pad_c = _round_up(max(c, 1), _LANE)          # rows occupy >= 128 lanes in VMEM
    bytes_per_row = (2 * pad_c * itm             # double-buffered logits tile
                     + 2 * _LANE * 4             # double-buffered (tb,1) targets
                     + 4 * pad_c * 4)            # ~4 f32 (tb, C) temporaries
    tb, num_tiles, b_pad = _pick_tiling(b, bytes_per_row,
                                        _sublane_multiple(logits.dtype))
    if b_pad > b:                                # pad + mask ragged batches
        logits = jnp.pad(logits, ((0, 0), (0, b_pad - b), (0, 0)))
        tgt = jnp.pad(tgt, ((0, b_pad - b), (0, 0)), constant_values=-1)

    if gce_q is not None:
        kernel = functools.partial(_gce_kernel, weights=weights,
                                   q=float(gce_q), eps=float(eps))
    else:
        kernel = functools.partial(_ce_kernel, weights=weights)

    in_specs = [
        pl.BlockSpec((None, tb, c), lambda t, n: (n, t, 0)),
        pl.BlockSpec((tb, 1), lambda t, n: (t, 0)),
    ]
    out = _fused_group_call(kernel, in_specs, (logits, tgt), n_adv, num_tiles)
    num = jnp.sum(out[:, :, 0, 0], axis=1)                      # (N,)
    den = jnp.sum(out[:, :, 1, 0], axis=1)                      # (N,)
    return jnp.mean(num / den)


def _continuous_group_loss(preds_list, targets, *, square):
    """Mean over adversaries of MSE/MAE; lane-dense fused kernel for the group."""
    preds = jnp.stack(preds_list, axis=0)                       # (N, B, D)
    n_adv, b, d = preds.shape
    tgt = jnp.broadcast_to(
        jnp.reshape(targets.astype(jnp.float32), (-1, 1)), (b, d))

    # Lane-dense repack: flatten all elements and fold into rows of 128 lanes.
    n_el = b * d
    rows = pl.cdiv(n_el, _LANE)
    pad_el = rows * _LANE - n_el
    preds_flat = preds.reshape(n_adv, n_el)
    tgt_flat = tgt.reshape(n_el)
    if pad_el:
        preds_flat = jnp.pad(preds_flat, ((0, 0), (0, pad_el)))  # zero diff
        tgt_flat = jnp.pad(tgt_flat, (0, pad_el))
    preds2 = preds_flat.reshape(n_adv, rows, _LANE)
    tgt2 = tgt_flat.reshape(rows, _LANE)

    itm = jnp.dtype(preds.dtype).itemsize
    bytes_per_row = (2 * _LANE * itm     # double-buffered preds tile
                     + 2 * _LANE * 4     # double-buffered targets tile
                     + 2 * _LANE * 4)    # f32 temporaries
    tr, num_tiles, rows_pad = _pick_tiling(rows, bytes_per_row,
                                           _sublane_multiple(preds.dtype))
    if rows_pad > rows:
        preds2 = jnp.pad(preds2, ((0, 0), (0, rows_pad - rows), (0, 0)))
        tgt2 = jnp.pad(tgt2, ((0, rows_pad - rows), (0, 0)))

    kernel = functools.partial(_reg_kernel, square=square)
    in_specs = [
        pl.BlockSpec((None, tr, _LANE), lambda t, n: (n, t, 0)),
        pl.BlockSpec((tr, _LANE), lambda t, n: (t, 0)),
    ]
    out = _fused_group_call(kernel, in_specs, (preds2, tgt2), n_adv, num_tiles)
    num = jnp.sum(out[:, :, 0, 0], axis=1)                      # (N,)
    return jnp.mean(num / jnp.float32(n_el))


# ---------------------------------------------------------------------------
# AdvLosses.forward equivalent (host-side orchestration over groups)
# ---------------------------------------------------------------------------
def adv_losses_forward(adv_config, inputs, targets):
    """Mirrors AdvLosses.forward: returns (total_loss, per-group loss dict)."""
    losses = {}
    for cfg, inp, tar in zip(adv_config, inputs, targets):
        tar = tar.astype(jnp.int32 if cfg.type == 'categorical' else jnp.float32)
        if cfg.loss_fn in ('mse', 'mae'):
            group = _continuous_group_loss(inp, tar, square=(cfg.loss_fn == 'mse'))
        elif cfg.loss_fn == 'ce':
            group = _categorical_group_loss(inp, tar, cfg.loss_class_weights)
        elif cfg.loss_fn == 'gce':
            if cfg.loss_gce_alpha:
                group = _categorical_group_loss(inp, tar, cfg.loss_class_weights,
                                                gce_q=cfg.loss_gce_alpha)
            else:   # torch falls back to plain (unweighted) CrossEntropyLoss()
                group = _categorical_group_loss(inp, tar, None)
        else:
            raise ValueError(f"unsupported loss_fn: {cfg.loss_fn}")
        losses[cfg.group_name] = group * cfg.loss_weight
    return sum(losses.values()), losses


# ---------------------------------------------------------------------------
# pure-JAX reference (mirrors the PyTorch semantics)
# ---------------------------------------------------------------------------
def _ref_single(cfg, x, t):
    if cfg.loss_fn == 'mse':
        return jnp.mean((x - jnp.reshape(t, (-1, 1))) ** 2)
    if cfg.loss_fn == 'mae':
        return jnp.mean(jnp.abs(x - jnp.reshape(t, (-1, 1))))
    if cfg.loss_fn == 'gce' and cfg.loss_gce_alpha:
        w = jnp.asarray(cfg.loss_class_weights, jnp.float32)
        p = w * jax.nn.softmax(x.astype(jnp.float32), axis=1)
        pt = jnp.take_along_axis(p, t[:, None], axis=1)[:, 0] + 1e-9
        return jnp.mean((1.0 - pt ** cfg.loss_gce_alpha) / cfg.loss_gce_alpha)
    # 'ce' (and 'gce' without alpha, which falls back to plain CE)
    c = x.shape[1]
    w = (jnp.asarray(cfg.loss_class_weights, jnp.float32)
         if (cfg.loss_fn == 'ce' and cfg.loss_class_weights)
         else jnp.ones((c,), jnp.float32))
    logp = jax.nn.log_softmax(x.astype(jnp.float32), axis=1)
    nll = -jnp.take_along_axis(logp, t[:, None], axis=1)[:, 0]
    wt = w[t]
    return jnp.sum(wt * nll) / jnp.sum(wt)


def _reference_forward(adv_config, inputs, targets):
    losses = {}
    for cfg, inp, tar in zip(adv_config, inputs, targets):
        tar = tar.astype(jnp.int32 if cfg.type == 'categorical' else jnp.float32)
        group = sum(_ref_single(cfg, x, tar) for x in inp) / len(inp)
        losses[cfg.group_name] = group * cfg.loss_weight
    return sum(losses.values()), losses


# ---------------------------------------------------------------------------
if __name__ == "__main__":
    key = jax.random.PRNGKey(0)
    ks = jax.random.split(key, 10)

    B = 10   # deliberately not a multiple of 8: exercises pad + in-kernel masking
    # group 1: categorical CE, 4 classes, 2 adversaries, class weights
    C1 = 4
    g1_in = [jax.random.normal(ks[0], (B, C1), jnp.float32),
             jax.random.normal(ks[1], (B, C1), jnp.float32)]
    g1_tgt = jax.random.randint(ks[2], (B,), 0, C1)
    # group 2: continuous MSE, 1 adversary, (B, 1) outputs
    g2_in = [jax.random.normal(ks[3], (B, 1), jnp.float32)]
    g2_tgt = jax.random.normal(ks[4], (B,), jnp.float32)
    # group 3: categorical GCE, 2 classes, 2 adversaries
    C3 = 2
    g3_in = [jax.random.normal(ks[5], (B, C3), jnp.float32),
             jax.random.normal(ks[6], (B, C3), jnp.float32)]
    g3_tgt = jax.random.randint(ks[7], (B,), 0, C3)
    # group 4: continuous MAE, 1 adversary
    g4_in = [jax.random.normal(ks[8], (B, 1), jnp.float32)]
    g4_tgt = jax.random.normal(ks[9], (B,), jnp.float32)

    configs = [
        AdvConfig('adv_ce', 'categorical', 'ce', loss_weight=1.0,
                  loss_class_weights=[0.3, 0.2, 0.3, 0.2]),
        AdvConfig('adv_mse', 'continuous', 'mse', loss_weight=0.5),
        AdvConfig('adv_gce', 'categorical', 'gce', loss_weight=2.0,
                  loss_class_weights=[0.5, 0.5], loss_gce_alpha=0.7),
        AdvConfig('adv_mae', 'continuous', 'mae', loss_weight=0.25),
    ]
    inputs = [g1_in, g2_in, g3_in, g4_in]
    targets = [g1_tgt, g2_tgt, g3_tgt, g4_tgt]

    total, losses = adv_losses_forward(configs, inputs, targets)
    total = jax.block_until_ready(total)

    ref_total, ref_losses = _reference_forward(configs, inputs, targets)
    assert jnp.allclose(total, ref_total, atol=1e-5, rtol=1e-5), (total, ref_total)
    for name in losses:
        assert jnp.allclose(losses[name], ref_losses[name],
                            atol=1e-5, rtol=1e-5), (name, losses[name], ref_losses[name])

    print("KERNEL_OK")
</pallas_src>

<mosaic_0001>
module attributes {stable_mosaic.version = 11 : i64} {
  func.func @_ce_kernel(%arg0: i32, %arg1: i32, %arg2: memref<1x16x4xf32, #tpu.memory_space<vmem>>, %arg3: memref<16x1xi32, #tpu.memory_space<vmem>>, %arg4: memref<1x1x8x128xf32, #tpu.memory_space<vmem>>) attributes {dimension_semantics = [#tpu.dimension_semantics<parallel>, #tpu.dimension_semantics<parallel>], iteration_bounds = array<i64: 1, 2>, scalar_prefetch = 0 : i64, scratch_operands = 0 : i64, tpu.core_type = #tpu.core_type<tc>, window_params = [{transform_indices = @transform_0, window_bounds = array<i64: 1, 16, 4>}, {transform_indices = @transform_1, window_bounds = array<i64: 16, 1>}, {transform_indices = @transform_2, window_bounds = array<i64: 1, 1, 8, 128>}]} {
    %c0 = arith.constant 0 : index
    %c0_0 = arith.constant 0 : index
    %c0_1 = arith.constant 0 : index
    %0 = vector.load %arg2[%c0, %c0_0, %c0_1] : memref<1x16x4xf32, #tpu.memory_space<vmem>>, vector<1x16x4xf32>
    %1 = vector.shape_cast %0 : vector<1x16x4xf32> to vector<16x4xf32>
    %c0_2 = arith.constant 0 : index
    %c0_3 = arith.constant 0 : index
    %2 = vector.load %arg3[%c0_2, %c0_3] : memref<16x1xi32, #tpu.memory_space<vmem>>, vector<16x1xi32>
    %cst = arith.constant dense<0xFF800000> : vector<16xf32>
    %3 = vector.multi_reduction <maximumf>, %1, %cst [1] : vector<16x4xf32> to vector<16xf32>
    %4 = vector.shape_cast %3 : vector<16xf32> to vector<16x1xf32>
    %5 = vector.broadcast %4 : vector<16x1xf32> to vector<16x4xf32>
    %6 = arith.subf %1, %5 : vector<16x4xf32>
    %7 = math.exp %6 : vector<16x4xf32>
    %cst_4 = arith.constant dense<0.000000e+00> : vector<16xf32>
    %8 = vector.multi_reduction <add>, %7, %cst_4 [1] : vector<16x4xf32> to vector<16xf32>
    %9 = vector.shape_cast %8 : vector<16xf32> to vector<16x1xf32>
    %10 = math.log %9 : vector<16x1xf32>
    %11 = tpu.iota {dimensions = array<i32: 1>} : vector<16x4xi32>
    %12 = vector.broadcast %2 : vector<16x1xi32> to vector<16x4xi32>
    %13 = arith.cmpi eq, %11, %12 : vector<16x4xi32>
    %cst_5 = arith.constant 0.000000e+00 : f32
    %14 = vector.broadcast %cst_5 : f32 to vector<16x4xf32>
    %15 = arith.select %13, %6, %14 : vector<16x4xi1>, vector<16x4xf32>
    %cst_6 = arith.constant dense<0.000000e+00> : vector<16xf32>
    %16 = vector.multi_reduction <add>, %15, %cst_6 [1] : vector<16x4xf32> to vector<16xf32>
    %17 = vector.shape_cast %16 : vector<16xf32> to vector<16x1xf32>
    %18 = arith.subf %10, %17 : vector<16x1xf32>
    %cst_7 = arith.constant 0.000000e+00 : f32
    %19 = vector.broadcast %cst_7 : f32 to vector<16x1xf32>
    %c0_i32 = arith.constant 0 : i32
    %20 = vector.broadcast %c0_i32 : i32 to vector<16x1xi32>
    %21 = arith.cmpi eq, %2, %20 : vector<16x1xi32>
    %cst_8 = arith.constant 3.000000e-01 : f32
    %22 = vector.broadcast %cst_8 : f32 to vector<16x1xf32>
    %23 = arith.select %21, %22, %19 : vector<16x1xi1>, vector<16x1xf32>
    %c1_i32 = arith.constant 1 : i32
    %24 = vector.broadcast %c1_i32 : i32 to vector<16x1xi32>
    %25 = arith.cmpi eq, %2, %24 : vector<16x1xi32>
    %cst_9 = arith.constant 2.000000e-01 : f32
    %26 = vector.broadcast %cst_9 : f32 to vector<16x1xf32>
    %27 = arith.select %25, %26, %23 : vector<16x1xi1>, vector<16x1xf32>
    %c2_i32 = arith.constant 2 : i32
    %28 = vector.broadcast %c2_i32 : i32 to vector<16x1xi32>
    %29 = arith.cmpi eq, %2, %28 : vector<16x1xi32>
    %cst_10 = arith.constant 3.000000e-01 : f32
    %30 = vector.broadcast %cst_10 : f32 to vector<16x1xf32>
    %31 = arith.select %29, %30, %27 : vector<16x1xi1>, vector<16x1xf32>
    %c3_i32 = arith.constant 3 : i32
    %32 = vector.broadcast %c3_i32 : i32 to vector<16x1xi32>
    %33 = arith.cmpi eq, %2, %32 : vector<16x1xi32>
    %cst_11 = arith.constant 2.000000e-01 : f32
    %34 = vector.broadcast %cst_11 : f32 to vector<16x1xf32>
    %35 = arith.select %33, %34, %31 : vector<16x1xi1>, vector<16x1xf32>
    %36 = arith.mulf %35, %18 : vector<16x1xf32>
    %37 = vector.shape_cast %36 : vector<16x1xf32> to vector<1x16x1xf32>
    %cst_12 = arith.constant dense<0.000000e+00> : vector<1xf32>
    %38 = vector.multi_reduction <add>, %37, %cst_12 [1, 2] : vector<1x16x1xf32> to vector<1xf32>
    %39 = vector.shape_cast %38 : vector<1xf32> to vector<1x1x1xf32>
    %40 = vector.extract %39[0, 0, 0] : f32 from vector<1x1x1xf32>
    %41 = vector.shape_cast %35 : vector<16x1xf32> to vector<1x16x1xf32>
    %cst_13 = arith.constant dense<0.000000e+00> : vector<1xf32>
    %42 = vector.multi_reduction <add>, %41, %cst_13 [1, 2] : vector<1x16x1xf32> to vector<1xf32>
    %43 = vector.shape_cast %42 : vector<1xf32> to vector<1x1x1xf32>
    %44 = vector.extract %43[0, 0, 0] : f32 from vector<1x1x1xf32>
    %45 = tpu.iota {dimensions = array<i32: 0>} : vector<8x128xi32>
    %c0_i32_14 = arith.constant 0 : i32
    %46 = vector.broadcast %c0_i32_14 : i32 to vector<8x128xi32>
    %47 = arith.cmpi eq, %45, %46 : vector<8x128xi32>
    %c1_i32_15 = arith.constant 1 : i32
    %48 = vector.broadcast %c1_i32_15 : i32 to vector<8x128xi32>
    %49 = arith.cmpi eq, %45, %48 : vector<8x128xi32>
    %cst_16 = arith.constant 0.000000e+00 : f32
    %50 = vector.broadcast %44 : f32 to vector<8x128xf32>
    %51 = vector.broadcast %cst_16 : f32 to vector<8x128xf32>
    %52 = arith.select %49, %50, %51 : vector<8x128xi1>, vector<8x128xf32>
    %53 = vector.broadcast %40 : f32 to vector<8x128xf32>
    %54 = arith.select %47, %53, %52 : vector<8x128xi1>, vector<8x128xf32>
    %c0_17 = arith.constant 0 : index
    %c0_18 = arith.constant 0 : index
    %c0_19 = arith.constant 0 : index
    %c0_20 = arith.constant 0 : index
    %55 = vector.load %arg4[%c0_17, %c0_18, %c0_19, %c0_20] : memref<1x1x8x128xf32, #tpu.memory_space<vmem>>, vector<1x1x8x128xf32>
    %56 = vector.shape_cast %55 : vector<1x1x8x128xf32> to vector<8x128xf32>
    %57 = vector.shape_cast %54 : vector<8x128xf32> to vector<1x1x8x128xf32>
    tpu.vector_store %arg4[%c0_17, %c0_18, %c0_19, %c0_20], %57 {strides = array<i32>} : memref<1x1x8x128xf32, #tpu.memory_space<vmem>>, vector<1x1x8x128xf32>,
    return
  }
  func.func @transform_0(%arg0: i32, %arg1: i32) -> (i32, i32, i32) {
    %c0_i32 = arith.constant 0 : i32
    %c0_i32_0 = arith.constant 0 : i32
    return %arg1, %arg0, %c0_i32 : i32, i32, i32
  }
  func.func @transform_1(%arg0: i32, %arg1: i32) -> (i32, i32) {
    %c0_i32 = arith.constant 0 : i32
    %c0_i32_0 = arith.constant 0 : i32
    return %arg0, %c0_i32 : i32, i32
  }
  func.func @transform_2(%arg0: i32, %arg1: i32) -> (i32, i32, i32, i32) {
    %c0_i32 = arith.constant 0 : i32
    %c0_i32_0 = arith.constant 0 : i32
    %c0_i32_1 = arith.constant 0 : i32
    return %arg1, %arg0, %c0_i32, %c0_i32_0 : i32, i32, i32, i32
  }
}

</mosaic_0001>

<llo_original>
// kernel: tpu_custom_call.1
$region0: #{tpu_custom_call.1}
  #allocation0 [shape = 'u32[]', space=smem, size = 0x4, offset = 0x4, fixed_abs, tag = 'smem constant byte address 0x4 - core index']
  #allocation1 [shape = 'u32[144,128]{1,0:T(1,128)}', space=vmem, size = 0x12000, scoped, tag = 'internal scratch']
  %s0 = inlined_call_operand.vmem [shape: f32[2,16,4], index: 0, kind: input, shape index: {}]
  %s1 = inlined_call_operand.vmem [shape: s32[16,1], index: 1, kind: input, shape index: {}]
  %s2 = inlined_call_operand.hbm [shape: f32[2,1,8,128], index: 2, kind: output, shape index: {}]
  %s3 = sld [smem:[#allocation0]]
  $region41: #{tpu_custom_call.1} parent=0
    _
  %s5 = ssub.s32 1, %s3
  %s6 = scalar_select 0, %s5, %s3
  $region1: #{tpu_custom_call.1} parent=0
    #allocation2 [shape = 'u8[8192]{0}', space=vmem, size = 0x2000, scoped, tag = 'output window, operand 0']
    #allocation3 [shape = 's32[2]{0}', space=sflag, size = 0x8, scoped, tag = 'scoped memory for tpu_custom_call.1']
    %7 = vsyncpa [#allocation3], 0
    %s8 = scalar_lea.sflag [#allocation3], 1
    %9 = vsyncpa %s8, 0
    loop: start=0, step=1, limit=4
    $region2: #{tpu_custom_call.1} parent=1 // loop_pre_header
      _
    $region3: #{tpu_custom_call.1} parent=1 // loop_header
      %s11 = sphi 0, %s15
      %p12 = scmp.ge.s32.totalorder %s11, 4
      %s18 = sphi 0, %s30
      %s19 = sphi 0, %s26
      %s20 = sphi 0, %s18
      %s21 = sphi 0, %s19
      %s22 = sphi 0, %s20
      %s23 = sphi 0, %s21
      %s35 = sphi 0, %s37
      %s38 = sphi 0, %s35
      %s39 = sphi 0, %s38
      %s55 = sphi 0, %s39
      %s61 = sphi 0, %s63
      %s64 = sphi 0, %s61
      %s65 = sphi 0, %s64
      %s81 = sphi 0, %s65
      %s89 = sphi 0, %s91
      %s92 = sphi 0, %s89
      %s93 = sphi 0, %s92
      %s109 = sphi 0, %s93
    $region4: #{tpu_custom_call.1} parent=1 // loop_header_branch
      %14 = sbr.rel (%p12) target = $region8
    $region5: #{tpu_custom_call.1} parent=1 // loop_body
      %s16 = ssub.s32 %s11, 1
      %s17 = ssub.s32 %s11, 2
      %s24 = sadd.s32 1, %s19
      %p25 = scmp.ge.s32.totalorder %s24, 2
      %s26 = scalar_select %p25, 0, %s24
      %s27 = sadd.s32 1, %s18
      %s28 = scalar_select %p25, %s27, %s18
      %p29 = scmp.ge.s32.totalorder %s28, 1
      %s30 = scalar_select %p29, 0, %s28
      %s31 = ssub.s32 %s19, %s26
      %s32 = ssub.s32 %s18, %s30
      %s33 = sor.u32 %s31, %s32
      %p34 = scmp.eq.s32.totalorder %s33, 0
      %s36 = sadd.s32 %s35, 1
      %s37 = scalar_select %p34, %s35, %s36
      %p40 = pneg %p34
      %p41 = scmp.eq.s32.totalorder %s11, 1
      %p42 = por %p40, %p41
      %p43 = scmp.ne.s32.totalorder %s35, %s38
      %p44 = scmp.eq.s32.totalorder %s11, 0
      %p45 = por %p43, %p44
      %p46 = scmp.ne.s32.totalorder %s35, %s38
      %p47 = scmp.eq.s32.totalorder %s16, 1
      %p48 = por %p46, %p47
      %p49 = scmp.ne.s32.totalorder %s38, %s39
      %p50 = scmp.eq.s32.totalorder %s16, 0
      %p51 = por %p49, %p50
      %p52 = scmp.ne.s32.totalorder %s38, %s39
      %p53 = scmp.eq.s32.totalorder %s17, 1
      %p54 = por %p52, %p53
      %p56 = scmp.ne.s32.totalorder %s39, %s55
      %p57 = scmp.eq.s32.totalorder %s17, 0
      %p58 = por %p56, %p57
      %s59 = ssub.s32 %s18, %s30
      %p60 = scmp.eq.s32.totalorder %s59, 0
      %s62 = sadd.s32 %s61, 1
      %s63 = scalar_select %p60, %s61, %s62
      %p66 = pneg %p60
      %p67 = scmp.eq.s32.totalorder %s11, 1
      %p68 = por %p66, %p67
      %p69 = scmp.ne.s32.totalorder %s61, %s64
      %p70 = scmp.eq.s32.totalorder %s11, 0
      %p71 = por %p69, %p70
      %p72 = scmp.ne.s32.totalorder %s61, %s64
      %p73 = scmp.eq.s32.totalorder %s16, 1
      %p74 = por %p72, %p73
      %p75 = scmp.ne.s32.totalorder %s64, %s65
      %p76 = scmp.eq.s32.totalorder %s16, 0
      %p77 = por %p75, %p76
      %p78 = scmp.ne.s32.totalorder %s64, %s65
      %p79 = scmp.eq.s32.totalorder %s17, 1
      %p80 = por %p78, %p79
      %p82 = scmp.ne.s32.totalorder %s65, %s81
      %p83 = scmp.eq.s32.totalorder %s17, 0
      %p84 = por %p82, %p83
      %s85 = ssub.s32 %s19, %s26
      %s86 = ssub.s32 %s18, %s30
      %s87 = sor.u32 %s85, %s86
      %p88 = scmp.eq.s32.totalorder %s87, 0
      %s90 = sadd.s32 %s89, 1
      %s91 = scalar_select %p88, %s89, %s90
      %p94 = pneg %p88
      %p95 = scmp.eq.s32.totalorder %s11, 1
      %p96 = por %p94, %p95
      %p97 = scmp.ne.s32.totalorder %s89, %s92
      %p98 = scmp.eq.s32.totalorder %s11, 0
      %p99 = por %p97, %p98
      %p100 = scmp.ne.s32.totalorder %s89, %s92
      %p101 = scmp.eq.s32.totalorder %s16, 1
      %p102 = por %p100, %p101
      %p103 = scmp.ne.s32.totalorder %s92, %s93
      %p104 = scmp.eq.s32.totalorder %s16, 0
      %p105 = por %p103, %p104
      %p106 = scmp.ne.s32.totalorder %s92, %s93
      %p107 = scmp.eq.s32.totalorder %s17, 1
      %p108 = por %p106, %p107
      %p110 = scmp.ne.s32.totalorder %s93, %s109
      %p111 = scmp.eq.s32.totalorder %s17, 0
      %p112 = por %p110, %p111
      %p113 = scmp.le.s32.totalorder 1, %s11
      %p114 = scmp.lt.s32.totalorder %s11, 3
      %p115 = pnand %p113, %p114
      %p116 = pneg %p115
      // Predicated region
      $region9: #{tpu_custom_call.1} parent=5 // pred_check
        _
      $region10: #{tpu_custom_call.1} parent=5 // pred_check_branch
        %118 = sbr.rel (%p115) target = $region12
      $region11: #{tpu_custom_call.1} parent=5 // pred_region
        %s119 = ssub.s32 %s11, 1
        // Predicated region
        $region13: #{tpu_custom_call.1} parent=11 // pred_check
          %p120 = pneg %p77
        $region14: #{tpu_custom_call.1} parent=11 // pred_check_branch
          %122 = sbr.rel (%p120) target = $region16
        $region15: #{tpu_custom_call.1} parent=11 // pred_region
          %s123 = smul.u32 2, %s20
          %p124 = scmp.lt.s32.totalorder %s123, 1
          %s125 = scalar_select %p124, %s123, 1
          %s126 = smul.addr %s125, 8
          %s127 = scalar_lea.vmem %s1, %s126
          %s128 = smul.u32 2, %s20
        $region16: #{tpu_custom_call.1} parent=11 // pred_fallthru
          _
      $region12: #{tpu_custom_call.1} parent=5 // pred_fallthru
        _
      %p129 = scmp.lt.s32.totalorder %s11, 2
      // Predicated region
      $region17: #{tpu_custom_call.1} parent=5 // pred_check
        %p130 = pneg %p129
      $region18: #{tpu_custom_call.1} parent=5 // pred_check_branch
        %132 = sbr.rel (%p130) target = $region20
      $region19: #{tpu_custom_call.1} parent=5 // pred_region
        // Predicated region
        $region21: #{tpu_custom_call.1} parent=19 // pred_check
          %p133 = pneg %p45
        $region22: #{tpu_custom_call.1} parent=19 // pred_check_branch
          %135 = sbr.rel (%p133) target = $region24
        $region23: #{tpu_custom_call.1} parent=19 // pred_region
          %s136 = smul.u32 2, %s18
          %p137 = scmp.lt.s32.totalorder %s19, 1
          %s138 = scalar_select %p137, %s19, 1
          %p139 = scmp.lt.s32.totalorder %s136, 1
          %s140 = scalar_select %p139, %s136, 1
          %s141 = smul.addr %s138, 2
          %s142 = sadd.s32 %s140, %s141
          %s143 = smul.addr %s142, 8
          %s144 = scalar_lea.vmem %s0, %s143
          %s145 = smul.u32 2, %s18
        $region24: #{tpu_custom_call.1} parent=19 // pred_fallthru
          _
      $region20: #{tpu_custom_call.1} parent=5 // pred_fallthru
        _
      %p146 = scmp.le.s32.totalorder 1, %s11
      %p147 = scmp.lt.s32.totalorder %s11, 3
      %p148 = pnand %p146, %p147
      %p149 = pneg %p148
      // Predicated region
      $region25: #{tpu_custom_call.1} parent=5 // pred_check
        _
      $region26: #{tpu_custom_call.1} parent=5 // pred_check_branch
        %151 = sbr.rel (%p148) target = $region28
      $region27: #{tpu_custom_call.1} parent=5 // pred_region
        %s152 = ssub.s32 %s11, 1
        %s153 = smul.u32 2, %s20
        %p154 = scmp.lt.s32.totalorder %s21, 1
        %s155 = scalar_select %p154, %s21, 1
        %p156 = scmp.lt.s32.totalorder %s153, 1
        %s157 = scalar_select %p156, %s153, 1
        %s158 = smul.addr %s155, 2
        %s159 = sadd.s32 %s157, %s158
        %s160 = smul.addr %s159, 8
        %s161 = scalar_lea.vmem %s0, %s160
        %p162 = pneg %p51
        %p163 = pneg %p48
        %s164 = smul.u32 2, %s20
        %p165 = scmp.lt.s32.totalorder %s164, 1
        %s166 = scalar_select %p165, %s164, 1
        %s167 = smul.addr %s166, 8
        %s168 = scalar_lea.vmem %s1, %s167
        %p169 = pneg %p77
        %p170 = pneg %p74
        %p171 = pneg %p105
        %p172 = pneg %p102
        %s173 = sand.u32 %s92, 1
        %s174 = scalar_lea.sflag [#allocation3], %s173
        %s175 = sand.u32 %s92, 1
        %s176 = smul.addr %s175, 8
        %s177 = scalar_lea.vmem [#allocation2], %s176
        %s178 = smul.u32 2, %s20
        %p179 = scmp.lt.s32.totalorder %s21, 1
        %s180 = scalar_select %p179, %s21, 1
        %p181 = scmp.lt.s32.totalorder %s178, 1
        %s182 = scalar_select %p181, %s178, 1
        %s183 = smul.addr %s180, 2
        %s184 = sadd.s32 %s182, %s183
        %s185 = smul.addr %s184, 8
        %s186 = scalar_lea.vmem %s0, %s185
        %s187 = smul.u32 2, %s20
        %s188 = smul.u32 2, %s20
        %p189 = scmp.lt.s32.totalorder %s188, 1
        %s190 = scalar_select %p189, %s188, 1
        %s191 = smul.addr %s190, 8
        %s192 = scalar_lea.vmem %s1, %s191
        %s193 = smul.u32 2, %s20
        %v194 = vld [vmem:[%s186] sm:$0xff]
        %v195 = vld [vmem:[%s186 + $0x8] sm:$0xff]
        %v196 = vld [vmem:[%s192] sm:$0xff]
        %v197 = vld [vmem:[%s192 + $0x8] sm:$0xff]
        %vm198 = vcmask 31744
        %v199 = vsel %vm198, %v194, -inf
        %200 = vmax.xlane.f32.xlu0 %v199
        %v201 = vpop.xlane.xlu0 %200
        %v202 = vsel %vm198, %v195, -inf
        %203 = vmax.xlane.f32.xlu0 %v202
        %v204 = vpop.xlane.xlu0 %203
        %v205 = vsub.f32 %v194, %v201
        %v206 = vsub.f32 %v195, %v204
        %v207 = vmul.f32 %v205, 1.442695
        %v208 = vpow.pop %v207
        %v209 = vmul.f32 %v206, 1.442695
        %v210 = vpow.pop %v209
        %v211 = vsel %vm198, %v208, 0.0
        %212 = vadd.xlane.f32.xlu0 %v211
        %v213 = vpop.xlane.xlu0 %212
        %v214 = vsel %vm198, %v210, 0.0
        %215 = vadd.xlane.f32.xlu0 %v214
        %v216 = vpop.xlane.xlu0 %215
        %v217 = vlog2.pop %v213
        %v218 = vmul.f32 %v217, 0.6931472
        %v219 = vlog2.pop %v216
        %v220 = vmul.f32 %v219, 0.6931472
        %v221 = vlaneseq
        %v222 = vand.u32 %v221, 127
        %223 = vset.pattern.permute.xlu0 0
        %224 = vperm.xlu0 %223, %v196
        %v225 = vpop.permute.xlu0 %224
        %226 = vset.pattern.permute.xlu0 0
        %227 = vperm.xlu0 %226, %v197
        %v228 = vpop.permute.xlu0 %227
        %vm229 = vcmp.eq.s32.totalorder %v222, %v225
        %vm230 = vcmp.eq.s32.totalorder %v222, %v228
        %v231 = vsel %vm229, %v205, 0.0
        %v232 = vsel %vm230, %v206, 0.0
        %v233 = vsel %vm198, %v231, 0.0
        %234 = vadd.xlane.f32.xlu0 %v233
        %v235 = vpop.xlane.xlu0 %234
        %v236 = vsel %vm198, %v232, 0.0
        %237 = vadd.xlane.f32.xlu0 %v236
        %v238 = vpop.xlane.xlu0 %237
        %v239 = vsub.f32 %v218, %v235
        %v240 = vsub.f32 %v220, %v238
        %vm241 = vcmp.eq.s32.totalorder %v196, 0
        %vm242 = vcmp.eq.s32.totalorder %v197, 0
        %v243 = vsel %vm241, 0.3, 0.0
        %v244 = vsel %vm242, 0.3, 0.0
        %vm245 = vcmp.eq.s32.totalorder %v196, 1
        %vm246 = vcmp.eq.s32.totalorder %v197, 1
        %v247 = vsel %vm245, 0.2, %v243
        %v248 = vsel %vm246, 0.2, %v244
        %vm249 = vcmp.eq.s32.totalorder %v196, 2
        %vm250 = vcmp.eq.s32.totalorder %v197, 2
        %v251 = vsel %vm249, 0.3, %v247
        %v252 = vsel %vm250, 0.3, %v248
        %vm253 = vcmp.eq.s32.totalorder %v196, 3
        %vm254 = vcmp.eq.s32.totalorder %v197, 3
        %v255 = vsel %vm253, 0.2, %v251
        %v256 = vsel %vm254, 0.2, %v252
        %v257 = vmul.f32 %v255, %v239
        %v258 = vmul.f32 %v256, %v240
        %vm259 = vcmask 7168
        %v260 = vsel %vm259, %v257, 0.0
        %v261 = vsel %vm259, %v258, 0.0
        %v262 = vadd.f32 %v260, %v261
        %263 = vadd.xlane.f32.xlu0 %v262
        %v264 = vpop.xlane.xlu0 %263
        %v265 = vrot.slane %v264, 4
        %v266 = vadd.f32 %v264, %v265
        %v267 = vrot.slane %v266, 2
        %v268 = vadd.f32 %v266, %v267
        %v269 = vrot.slane %v268, 1
        %v270 = vadd.f32 %v268, %v269
        %s271 = vtos %v270
        %v272 = vsel %vm259, %v255, 0.0
        %v273 = vsel %vm259, %v256, 0.0
        %v274 = vadd.f32 %v272, %v273
        %275 = vadd.xlane.f32.xlu0 %v274
        %v276 = vpop.xlane.xlu0 %275
        %v277 = vrot.slane %v276, 4
        %v278 = vadd.f32 %v276, %v277
        %v279 = vrot.slane %v278, 2
        %v280 = vadd.f32 %v278, %v279
        %v281 = vrot.slane %v280, 1
        %v282 = vadd.f32 %v280, %v281
        %s283 = vtos %v282
        %v284 = vlaneseq
        %v285 = vshrl.u32 %v284, 7
        %vm286 = vcmp.eq.s32.totalorder %v285, 0
        %vm287 = vcmp.eq.s32.totalorder %v285, 1
        %v288 = vstv %s283
        %v289 = vsel %vm287, %v288, 0.0
        %v290 = vstv %s271
        %v291 = vsel %vm286, %v290, %v289
        %292 = vst [vmem:[%s177] sm:$0xff] %v291
        %s293 = sand.u32 %s92, 1
        %s294 = scalar_lea.sflag [#allocation3], %s293
        %s295 = sand.u32 %s92, 1
        %s296 = smul.addr %s295, 8
        %s297 = scalar_lea.vmem [#allocation2], %s296
        // Predicated region
        $region29: #{tpu_custom_call.1} parent=27 // pred_check
          %p298 = pneg %p102
        $region30: #{tpu_custom_call.1} parent=27 // pred_check_branch
          %300 = sbr.rel (%p298) target = $region32
        $region31: #{tpu_custom_call.1} parent=27 // pred_region
          %s302 = ssub.s32 128, 128
          %303 = vsyncadd %s294, %s302
          %s304 = sadd.s32 %s20, %s21
          %s305 = smul.addr %s304, 128
          %s306 = scalar_lea.hbm %s2, %s305
          %s308 = sshll.u32 %s297, 4
          %s309 = int_to_ptr.vmem [resolvable:$true] %s308
          %311 = dma.vmem_to_hbm [thread:$0]  %s309, 128, %s306, %s294
        $region32: #{tpu_custom_call.1} parent=27 // pred_fallthru
          _
      $region28: #{tpu_custom_call.1} parent=5 // pred_fallthru
        _
      %p312 = scmp.le.s32.totalorder 2, %s11
      // Predicated region
      $region33: #{tpu_custom_call.1} parent=5 // pred_check
        %p313 = pneg %p312
      $region34: #{tpu_custom_call.1} parent=5 // pred_check_branch
        %315 = sbr.rel (%p313) target = $region36
      $region35: #{tpu_custom_call.1} parent=5 // pred_region
        %s316 = ssub.s32 %s11, 2
        // Predicated region
        $region37: #{tpu_custom_call.1} parent=35 // pred_check
          %p317 = pneg %p108
        $region38: #{tpu_custom_call.1} parent=35 // pred_check_branch
          %319 = sbr.rel (%p317) target = $region40
        $region39: #{tpu_custom_call.1} parent=35 // pred_region
          %s320 = sand.u32 %s93, 1
          %s321 = scalar_lea.sflag [#allocation3], %s320
          %s322 = sand.u32 %s93, 1
          %s323 = smul.addr %s322, 8
          %s324 = scalar_lea.vmem [#allocation2], %s323
          %325 = dma.done %s321, 128
        $region40: #{tpu_custom_call.1} parent=35 // pred_fallthru
          _
      $region36: #{tpu_custom_call.1} parent=5 // pred_fallthru
        _
    $region6: #{tpu_custom_call.1} parent=1 // loop_footer
      %s15 = sadd.s32 1, %s11
    $region7: #{tpu_custom_call.1} parent=1 // loop_footer_branch
      %10 = sbr.rel target = $region3
    $region8: #{tpu_custom_call.1} parent=1 // loop_exit
      _
    %326 = vsyncpa [#allocation3], 1
    %s327 = scalar_lea.sflag [#allocation3], 1
    %328 = vsyncpa %s327, 1

</llo_original>
